<compile_context>
chip_gen: v6e
topology: v6e:2x2x1
jax: 0.10.0
libtpu: 0.0.40
codegen_flags: <defaults>
</compile_context>

<pallas_src>
import jax
import jax.numpy as jnp
from jax.experimental import pallas as pl
from jax.experimental.pallas import tpu as pltpu


def critic_kernel(x_ref, w1_ref, b1_ref, wv_ref, mask_ref, out_ref):
    """x:[TM,H] bf16, w1:[H,H] bf16 (resident), b1:[1,H] f32, wv:[1,H] f32,
    mask:[1,TM] f32, out:[1,TM] f32."""
    # Frozen base-model dense layer: bf16 x bf16 -> f32 on the MXU, full
    # H-deep contraction in one shot (w1 is VMEM-resident, no K loop).
    h = jnp.dot(x_ref[...], w1_ref[...], preferred_element_type=jnp.float32)  # (TM, H)
    h = jnp.tanh(h + b1_ref[...])                                             # EUP/VPU

    # Value head (nn.Linear(H, 1) sans bias) off the MXU:
    # VPU elementwise multiply + XLU lane reduction.
    v = jnp.sum(h * wv_ref[...], axis=-1)                                     # (TM,)

    # attention_mask gate commutes with the linear head; apply to v.
    out_ref[...] = v[None, :] * mask_ref[...]                                 # lane-dense (1, TM)


def _vmem_budget_bytes():
    # Per-generation VMEM ceiling (v7x: 64 MiB/TC, v5e/v6e: 128 MiB) with
    # ~25% headroom for compiler-internal scratch, instead of a fixed 32 MiB.
    try:
        cap = pltpu.get_tpu_info().vmem_capacity_bytes
    except Exception:
        cap = 64 * 1024 * 1024  # conservative (v7x-sized) fallback
    return int(cap * 0.75)


def _pick_tm(m_tokens, tm_max):
    # Largest multiple of 128 <= tm_max that still yields >= 2 M tiles, so the
    # "parallel" grid axis gives both v7x TensorCores work; falls back to 128
    # for tiny problems.
    tm = max(128, (tm_max // 128) * 128)
    while tm > 128 and pl.cdiv(m_tokens, tm) < 2:
        tm -= 128
    return tm


def critic_forward(input_ids, attention_mask, num_actions, params, *, tm_max=512):
    """Returns values of shape (B, num_actions), like the PyTorch Critic."""
    B, S = input_ids.shape
    H = params["emb"].shape[1]
    M = B * S

    assert H % 128 == 0, H
    tm = _pick_tm(M, tm_max)

    # VMEM fit check for the resident-w1 strategy (conservatively assume the
    # constant-index w1 block is still double-buffered).
    vmem_limit = _vmem_budget_bytes()
    est_vmem = (2 * tm * H * 2      # x tiles, double-buffered bf16
                + 2 * H * H * 2     # resident w1, bf16
                + 2 * 2 * H * 4     # b1, wv f32
                + 2 * tm * 4        # mask tiles f32
                + 2 * tm * 4)       # out tiles f32
    # TODO(synk): for H where resident w1 no longer fits (roughly H > 2048 on
    # v7x / H > 4096 on v6e), reintroduce an N grid axis over w1 columns with a
    # (1, tm) partial-sum scratch instead of keeping w1 fully resident.
    assert est_vmem <= vmem_limit, (est_vmem, vmem_limit)

    # TODO(synk): the real base_model is an arbitrary frozen HF transformer;
    # only a single dense+tanh stand-in is reproduced.  The embedding gather
    # stays in plain JAX (bf16 table -> bf16 activations, no extra cast pass);
    # fusing it in-kernel would need a scalar-prefetched row gather.
    x = jnp.take(params["emb"], input_ids.reshape(-1), axis=0)   # (M, H) bf16
    mask = attention_mask.reshape(1, M).astype(jnp.float32)

    # Pad tokens up to a multiple of TM (padded rows are sliced off afterwards).
    m_pad = pl.cdiv(M, tm) * tm
    if m_pad != M:
        x = jnp.pad(x, ((0, m_pad - M), (0, 0)))
        mask = jnp.pad(mask, ((0, 0), (0, m_pad - M)))
    g_m = m_pad // tm

    b1 = params["b1"].astype(jnp.float32)                 # (1, H)
    wv = params["wv"].reshape(1, H).astype(jnp.float32)   # (1, H)

    out = pl.pallas_call(
        critic_kernel,
        out_shape=jax.ShapeDtypeStruct((1, m_pad), jnp.float32),
        grid_spec=pltpu.PrefetchScalarGridSpec(
            num_scalar_prefetch=0,
            grid=(g_m,),                                        # M tiles only
            in_specs=[
                pl.BlockSpec((tm, H), lambda i: (i, 0)),        # x tile
                pl.BlockSpec((H, H), lambda i: (0, 0)),         # w1 (VMEM-resident)
                pl.BlockSpec((1, H), lambda i: (0, 0)),         # b1 (resident)
                pl.BlockSpec((1, H), lambda i: (0, 0)),         # wv (resident)
                pl.BlockSpec((1, tm), lambda i: (0, i)),        # mask (lane-major)
            ],
            out_specs=pl.BlockSpec((1, tm), lambda i: (0, i)),  # lane-dense values
        ),
        compiler_params=pltpu.CompilerParams(
            dimension_semantics=("parallel",),
            vmem_limit_bytes=vmem_limit,
        ),
    )(x, params["w1"], b1, wv, mask)

    # Fold the scalar value-head bias here (cheaper than a padded (1,1) tile).
    values = out[0, :M].reshape(B, S) + params["bv"][0, 0]   # squeeze(-1)
    return values[:, -num_actions:]                          # last num_actions tokens


def make_params(key, vocab, hidden):
    k_emb, k_w1, k_b1, k_wv, k_bv = jax.random.split(key, 5)
    scale = 1.0 / jnp.sqrt(hidden)
    return {
        # Frozen base-model params stored in bf16 once (no per-forward casts).
        "emb": (jax.random.normal(k_emb, (vocab, hidden), jnp.float32) * 0.02
                ).astype(jnp.bfloat16),
        "w1": jax.random.uniform(k_w1, (hidden, hidden), jnp.float32, -scale, scale
                                 ).astype(jnp.bfloat16),
        "b1": jax.random.uniform(k_b1, (1, hidden), jnp.float32, -scale, scale),
        # Critic's own value head, kept in f32.
        "wv": jax.random.uniform(k_wv, (hidden, 1), jnp.float32, -scale, scale),
        "bv": jax.random.uniform(k_bv, (1, 1), jnp.float32, -scale, scale),
    }


if __name__ == "__main__":
    # Small but tile-friendly shapes: M = B*S = 256 -> tm auto-picks 128 so the
    # parallel M axis has 2 tiles (both v7x TensorCores busy); H = 256 is fully
    # resident, so the grid is just (2,).
    B, S, H, VOCAB, NUM_ACTIONS = 2, 128, 256, 128, 16

    key = jax.random.PRNGKey(0)
    k_ids, k_params = jax.random.split(key)

    input_ids = jax.random.randint(k_ids, (B, S), 0, VOCAB, dtype=jnp.int32)
    attention_mask = jnp.ones((B, S), dtype=jnp.int32)
    params = make_params(k_params, VOCAB, H)

    values = critic_forward(input_ids, attention_mask, NUM_ACTIONS, params)
    values = jax.block_until_ready(values)
    assert values.shape == (B, NUM_ACTIONS), values.shape

    # Pure-JAX f32 reference over the same bf16-rounded frozen weights
    # (kernel uses bf16 MXU operands with f32 accumulation).
    emb_f32 = params["emb"].astype(jnp.float32)
    w1_f32 = params["w1"].astype(jnp.float32)
    x_ref = emb_f32[input_ids].reshape(B * S, H)
    h_ref = jnp.tanh(x_ref @ w1_f32 + params["b1"]) * attention_mask.reshape(-1, 1)
    v_ref = (h_ref @ params["wv"] + params["bv"][0, 0]).reshape(B, S)[:, -NUM_ACTIONS:]
    err = float(jnp.max(jnp.abs(values - v_ref)))
    assert jnp.allclose(values, v_ref, atol=1e-2, rtol=1e-2), f"mismatch vs reference (max err {err})"

    print("KERNEL_OK")
</pallas_src>

<mosaic_0001>
module attributes {stable_mosaic.version = 11 : i64} {
  func.func @critic_kernel(%arg0: i32, %arg1: memref<128x256xbf16, #tpu.memory_space<vmem>>, %arg2: memref<256x256xbf16, #tpu.memory_space<vmem>>, %arg3: memref<1x256xf32, #tpu.memory_space<vmem>>, %arg4: memref<1x256xf32, #tpu.memory_space<vmem>>, %arg5: memref<1x128xf32, #tpu.memory_space<vmem>>, %arg6: memref<1x128xf32, #tpu.memory_space<vmem>>) attributes {dimension_semantics = [#tpu.dimension_semantics<parallel>], iteration_bounds = array<i64: 2>, scalar_prefetch = 0 : i64, scratch_operands = 0 : i64, tpu.core_type = #tpu.core_type<tc>, window_params = [{transform_indices = @transform_0, window_bounds = array<i64: 128, 256>}, {pipeline_mode = #tpu.pipeline_mode<synchronous>, transform_indices = @transform_1, window_bounds = array<i64: 256, 256>}, {pipeline_mode = #tpu.pipeline_mode<synchronous>, transform_indices = @transform_2, window_bounds = array<i64: 1, 256>}, {pipeline_mode = #tpu.pipeline_mode<synchronous>, transform_indices = @transform_3, window_bounds = array<i64: 1, 256>}, {transform_indices = @transform_4, window_bounds = array<i64: 1, 128>}, {transform_indices = @transform_5, window_bounds = array<i64: 1, 128>}]} {
    %c0 = arith.constant 0 : index
    %c0_0 = arith.constant 0 : index
    %0 = vector.load %arg1[%c0, %c0_0] : memref<128x256xbf16, #tpu.memory_space<vmem>>, vector<128x256xbf16>
    %c0_1 = arith.constant 0 : index
    %c0_2 = arith.constant 0 : index
    %1 = vector.load %arg2[%c0_1, %c0_2] : memref<256x256xbf16, #tpu.memory_space<vmem>>, vector<256x256xbf16>
    %cst = arith.constant dense<0.000000e+00> : vector<128x256xf32>
    %2 = tpu.matmul %0, %1, %cst {dimension_numbers = #tpu.dot_dimension_numbers<[1], [0], [0], [1], [0, 0, 1, 1], [], []>} : vector<128x256xbf16>, vector<256x256xbf16>, vector<128x256xf32> -> vector<128x256xf32>
    %c0_3 = arith.constant 0 : index
    %c0_4 = arith.constant 0 : index
    %3 = vector.load %arg3[%c0_3, %c0_4] : memref<1x256xf32, #tpu.memory_space<vmem>>, vector<1x256xf32>
    %4 = vector.broadcast %3 : vector<1x256xf32> to vector<128x256xf32>
    %5 = arith.addf %2, %4 : vector<128x256xf32>
    %6 = math.tanh %5 : vector<128x256xf32>
    %c0_5 = arith.constant 0 : index
    %c0_6 = arith.constant 0 : index
    %7 = vector.load %arg4[%c0_5, %c0_6] : memref<1x256xf32, #tpu.memory_space<vmem>>, vector<1x256xf32>
    %8 = vector.broadcast %7 : vector<1x256xf32> to vector<128x256xf32>
    %9 = arith.mulf %6, %8 : vector<128x256xf32>
    %cst_7 = arith.constant dense<0.000000e+00> : vector<128xf32>
    %10 = vector.multi_reduction <add>, %9, %cst_7 [1] : vector<128x256xf32> to vector<128xf32>
    %11 = vector.shape_cast %10 : vector<128xf32> to vector<1x128xf32>
    %c0_8 = arith.constant 0 : index
    %c0_9 = arith.constant 0 : index
    %12 = vector.load %arg5[%c0_8, %c0_9] : memref<1x128xf32, #tpu.memory_space<vmem>>, vector<1x128xf32>
    %13 = arith.mulf %11, %12 : vector<1x128xf32>
    %c0_10 = arith.constant 0 : index
    %c0_11 = arith.constant 0 : index
    %14 = vector.load %arg6[%c0_10, %c0_11] : memref<1x128xf32, #tpu.memory_space<vmem>>, vector<1x128xf32>
    tpu.vector_store %arg6[%c0_10, %c0_11], %13 {strides = array<i32>} : memref<1x128xf32, #tpu.memory_space<vmem>>, vector<1x128xf32>,
    return
  }
  func.func @transform_0(%arg0: i32) -> (i32, i32) {
    %c0_i32 = arith.constant 0 : i32
    %c0_i32_0 = arith.constant 0 : i32
    return %arg0, %c0_i32 : i32, i32
  }
  func.func @transform_1(%arg0: i32) -> (i32, i32) {
    %c0_i32 = arith.constant 0 : i32
    %c0_i32_0 = arith.constant 0 : i32
    %c0_i32_1 = arith.constant 0 : i32
    return %c0_i32, %c0_i32_0 : i32, i32
  }
  func.func @transform_2(%arg0: i32) -> (i32, i32) {
    %c0_i32 = arith.constant 0 : i32
    %c0_i32_0 = arith.constant 0 : i32
    %c0_i32_1 = arith.constant 0 : i32
    return %c0_i32, %c0_i32_0 : i32, i32
  }
  func.func @transform_3(%arg0: i32) -> (i32, i32) {
    %c0_i32 = arith.constant 0 : i32
    %c0_i32_0 = arith.constant 0 : i32
    %c0_i32_1 = arith.constant 0 : i32
    return %c0_i32, %c0_i32_0 : i32, i32
  }
  func.func @transform_4(%arg0: i32) -> (i32, i32) {
    %c0_i32 = arith.constant 0 : i32
    %c0_i32_0 = arith.constant 0 : i32
    return %c0_i32, %arg0 : i32, i32
  }
  func.func @transform_5(%arg0: i32) -> (i32, i32) {
    %c0_i32 = arith.constant 0 : i32
    %c0_i32_0 = arith.constant 0 : i32
    return %c0_i32, %arg0 : i32, i32
  }
}

</mosaic_0001>

<llo_original>
// kernel: tpu_custom_call.1
$region0: #{tpu_custom_call.1}
  #allocation0 [shape = 'u32[]', space=smem, size = 0x4, offset = 0x4, fixed_abs, tag = 'smem constant byte address 0x4 - core index']
  #allocation1 [shape = 'u32[144,128]{1,0:T(1,128)}', space=vmem, size = 0x12000, scoped, tag = 'internal scratch']
  %s0 = inlined_call_operand.hbm [shape: bf16[256,256], index: 0, kind: input, shape index: {}]
  %s1 = inlined_call_operand.hbm [shape: bf16[256,256], index: 1, kind: input, shape index: {}]
  %s2 = inlined_call_operand.vmem [shape: f32[1,256], index: 2, kind: input, shape index: {}]
  %s3 = inlined_call_operand.vmem [shape: f32[1,256], index: 3, kind: input, shape index: {}]
  %s4 = inlined_call_operand.vmem [shape: f32[1,256], index: 4, kind: input, shape index: {}]
  %s5 = inlined_call_operand.hbm [shape: f32[1,256], index: 5, kind: output, shape index: {}]
  %s6 = sld [smem:[#allocation0]]
  $region61: #{tpu_custom_call.1} parent=0
    _
  %s8 = ssub.s32 1, %s6
  %s9 = scalar_select 0, %s8, %s6
  $region1: #{tpu_custom_call.1} parent=0
    #allocation2 [shape = 'u8[131072]{0}', space=vmem, size = 0x20000, scoped, tag = 'input window, operand 0']
    #allocation3 [shape = 's32[2]{0}', space=sflag, size = 0x8, scoped, tag = 'scoped memory for tpu_custom_call.1']
    #allocation4 [shape = 's32[2]{0}', space=sflag, size = 0x8, scoped, tag = 'scoped memory for tpu_custom_call.1']
    #allocation5 [shape = 'u8[131072]{0}', space=vmem, size = 0x20000, scoped, tag = 'input window, operand 1, single buffered']
    #allocation6 [shape = 's32[1]{0}', space=sflag, size = 0x4, scoped, tag = 'scoped memory for tpu_custom_call.1']
    #allocation7 [shape = 'u8[1024]{0}', space=vmem, size = 0x400, scoped, tag = 'output window, operand 0']
    %10 = vsyncpa [#allocation3], 0
    %s11 = scalar_lea.sflag [#allocation3], 1
    %12 = vsyncpa %s11, 0
    %13 = vsyncpa [#allocation6], 0
    %14 = vsyncpa [#allocation4], 0
    %s15 = scalar_lea.sflag [#allocation4], 1
    %16 = vsyncpa %s15, 0
    loop: start=0, step=1, limit=4
    $region2: #{tpu_custom_call.1} parent=1 // loop_pre_header
      _
    $region3: #{tpu_custom_call.1} parent=1 // loop_header
      %s18 = sphi 0, %s22
      %p19 = scmp.ge.s32.totalorder %s18, 4
      %s28 = sphi 0, %s30
      %s31 = sphi 0, %s28
      %s32 = sphi 0, %s31
      %s48 = sphi 0, %s32
      %s52 = sphi 0, %s52
      %s54 = sphi 0, %s52
      %s55 = sphi 0, %s54
      %s69 = sphi 0, %s55
      %s73 = sphi 0, %s73
      %s75 = sphi 0, %s73
      %s76 = sphi 0, %s75
      %s90 = sphi 0, %s76
      %s94 = sphi 0, %s94
      %s96 = sphi 0, %s94
      %s97 = sphi 0, %s96
      %s111 = sphi 0, %s97
      %s117 = sphi 0, %s119
      %s120 = sphi 0, %s117
      %s121 = sphi 0, %s120
      %s137 = sphi 0, %s121
      %s143 = sphi 0, %s145
      %s146 = sphi 0, %s143
      %s147 = sphi 0, %s146
      %s163 = sphi 0, %s147
    $region4: #{tpu_custom_call.1} parent=1 // loop_header_branch
      %21 = sbr.rel (%p19) target = $region8
    $region5: #{tpu_custom_call.1} parent=1 // loop_body
      %s23 = ssub.s32 %s18, 1
      %s24 = ssub.s32 %s18, 2
      %s25 = sadd.s32 %s18, 1
      %s26 = ssub.s32 %s18, %s25
      %p27 = scmp.eq.s32.totalorder %s26, 0
      %s29 = sadd.s32 %s28, 1
      %s30 = scalar_select %p27, %s28, %s29
      %p33 = pneg %p27
      %p34 = scmp.eq.s32.totalorder %s18, 1
      %p35 = por %p33, %p34
      %p36 = scmp.ne.s32.totalorder %s28, %s31
      %p37 = scmp.eq.s32.totalorder %s18, 0
      %p38 = por %p36, %p37
      %p39 = scmp.ne.s32.totalorder %s28, %s31
      %p40 = scmp.eq.s32.totalorder %s23, 1
      %p41 = por %p39, %p40
      %p42 = scmp.ne.s32.totalorder %s31, %s32
      %p43 = scmp.eq.s32.totalorder %s23, 0
      %p44 = por %p42, %p43
      %p45 = scmp.ne.s32.totalorder %s31, %s32
      %p46 = scmp.eq.s32.totalorder %s24, 1
      %p47 = por %p45, %p46
      %p49 = scmp.ne.s32.totalorder %s32, %s48
      %p50 = scmp.eq.s32.totalorder %s24, 0
      %p51 = por %p49, %p50
      %s53 = sadd.s32 %s52, 1
      %p56 = scmp.eq.s32.totalorder %s18, 1
      %p57 = scmp.ne.s32.totalorder %s52, %s54
      %p58 = scmp.eq.s32.totalorder %s18, 0
      %p59 = por %p57, %p58
      %p60 = scmp.ne.s32.totalorder %s52, %s54
      %p61 = scmp.eq.s32.totalorder %s23, 1
      %p62 = por %p60, %p61
      %p63 = scmp.ne.s32.totalorder %s54, %s55
      %p64 = scmp.eq.s32.totalorder %s23, 0
      %p65 = por %p63, %p64
      %p66 = scmp.ne.s32.totalorder %s54, %s55
      %p67 = scmp.eq.s32.totalorder %s24, 1
      %p68 = por %p66, %p67
      %p70 = scmp.ne.s32.totalorder %s55, %s69
      %p71 = scmp.eq.s32.totalorder %s24, 0
      %p72 = por %p70, %p71
      %s74 = sadd.s32 %s73, 1
      %p77 = scmp.eq.s32.totalorder %s18, 1
      %p78 = scmp.ne.s32.totalorder %s73, %s75
      %p79 = scmp.eq.s32.totalorder %s18, 0
      %p80 = por %p78, %p79
      %p81 = scmp.ne.s32.totalorder %s73, %s75
      %p82 = scmp.eq.s32.totalorder %s23, 1
      %p83 = por %p81, %p82
      %p84 = scmp.ne.s32.totalorder %s75, %s76
      %p85 = scmp.eq.s32.totalorder %s23, 0
      %p86 = por %p84, %p85
      %p87 = scmp.ne.s32.totalorder %s75, %s76
      %p88 = scmp.eq.s32.totalorder %s24, 1
      %p89 = por %p87, %p88
      %p91 = scmp.ne.s32.totalorder %s76, %s90
      %p92 = scmp.eq.s32.totalorder %s24, 0
      %p93 = por %p91, %p92
      %s95 = sadd.s32 %s94, 1
      %p98 = scmp.eq.s32.totalorder %s18, 1
      %p99 = scmp.ne.s32.totalorder %s94, %s96
      %p100 = scmp.eq.s32.totalorder %s18, 0
      %p101 = por %p99, %p100
      %p102 = scmp.ne.s32.totalorder %s94, %s96
      %p103 = scmp.eq.s32.totalorder %s23, 1
      %p104 = por %p102, %p103
      %p105 = scmp.ne.s32.totalorder %s96, %s97
      %p106 = scmp.eq.s32.totalorder %s23, 0
      %p107 = por %p105, %p106
      %p108 = scmp.ne.s32.totalorder %s96, %s97
      %p109 = scmp.eq.s32.totalorder %s24, 1
      %p110 = por %p108, %p109
      %p112 = scmp.ne.s32.totalorder %s97, %s111
      %p113 = scmp.eq.s32.totalorder %s24, 0
      %p114 = por %p112, %p113
      %s115 = ssub.s32 %s18, %s25
      %p116 = scmp.eq.s32.totalorder %s115, 0
      %s118 = sadd.s32 %s117, 1
      %s119 = scalar_select %p116, %s117, %s118
      %p122 = pneg %p116
      %p123 = scmp.eq.s32.totalorder %s18, 1
      %p124 = por %p122, %p123
      %p125 = scmp.ne.s32.totalorder %s117, %s120
      %p126 = scmp.eq.s32.totalorder %s18, 0
      %p127 = por %p125, %p126
      %p128 = scmp.ne.s32.totalorder %s117, %s120
      %p129 = scmp.eq.s32.totalorder %s23, 1
      %p130 = por %p128, %p129
      %p131 = scmp.ne.s32.totalorder %s120, %s121
      %p132 = scmp.eq.s32.totalorder %s23, 0
      %p133 = por %p131, %p132
      %p134 = scmp.ne.s32.totalorder %s120, %s121
      %p135 = scmp.eq.s32.totalorder %s24, 1
      %p136 = por %p134, %p135
      %p138 = scmp.ne.s32.totalorder %s121, %s137
      %p139 = scmp.eq.s32.totalorder %s24, 0
      %p140 = por %p138, %p139
      %s141 = ssub.s32 %s18, %s25
      %p142 = scmp.eq.s32.totalorder %s141, 0
      %s144 = sadd.s32 %s143, 1
      %s145 = scalar_select %p142, %s143, %s144
      %p148 = pneg %p142
      %p149 = scmp.eq.s32.totalorder %s18, 1
      %p150 = por %p148, %p149
      %p151 = scmp.ne.s32.totalorder %s143, %s146
      %p152 = scmp.eq.s32.totalorder %s18, 0
      %p153 = por %p151, %p152
      %p154 = scmp.ne.s32.totalorder %s143, %s146
      %p155 = scmp.eq.s32.totalorder %s23, 1
      %p156 = por %p154, %p155
      %p157 = scmp.ne.s32.totalorder %s146, %s147
      %p158 = scmp.eq.s32.totalorder %s23, 0
      %p159 = por %p157, %p158
      %p160 = scmp.ne.s32.totalorder %s146, %s147
      %p161 = scmp.eq.s32.totalorder %s24, 1
      %p162 = por %p160, %p161
      %p164 = scmp.ne.s32.totalorder %s147, %s163
      %p165 = scmp.eq.s32.totalorder %s24, 0
      %p166 = por %p164, %p165
      %p167 = scmp.le.s32.totalorder 1, %s18
      %p168 = scmp.lt.s32.totalorder %s18, 3
      %p169 = pnand %p167, %p168
      %p170 = pneg %p169
      // Predicated region
      $region9: #{tpu_custom_call.1} parent=5 // pred_check
        _
      $region10: #{tpu_custom_call.1} parent=5 // pred_check_branch
        %172 = sbr.rel (%p169) target = $region12
      $region11: #{tpu_custom_call.1} parent=5 // pred_region
        %s173 = ssub.s32 %s18, 1
        // Predicated region
        $region13: #{tpu_custom_call.1} parent=11 // pred_check
          %p174 = pneg %p65
        $region14: #{tpu_custom_call.1} parent=11 // pred_check_branch
          %176 = sbr.rel (%p174) target = $region16
        $region15: #{tpu_custom_call.1} parent=11 // pred_region
          %s178 = ssub.s32 4096, 4096
          %179 = vsyncadd [#allocation6], %s178
          %s180 = sshll.u32 [#allocation5], 4
          %s181 = int_to_ptr.vmem [resolvable:$true] %s180
          %186 = dma.hbm_to_vmem [thread:$0]  %s1, 4096, %s181, [#allocation6], 128, 128, 8
        $region16: #{tpu_custom_call.1} parent=11 // pred_fallthru
          _
        // Predicated region
        $region17: #{tpu_custom_call.1} parent=11 // pred_check
          %p187 = pneg %p86
        $region18: #{tpu_custom_call.1} parent=11 // pred_check_branch
          %189 = sbr.rel (%p187) target = $region20
        $region19: #{tpu_custom_call.1} parent=11 // pred_region
          _
        $region20: #{tpu_custom_call.1} parent=11 // pred_fallthru
          _
        // Predicated region
        $region21: #{tpu_custom_call.1} parent=11 // pred_check
          %p190 = pneg %p107
        $region22: #{tpu_custom_call.1} parent=11 // pred_check_branch
          %192 = sbr.rel (%p190) target = $region24
        $region23: #{tpu_custom_call.1} parent=11 // pred_region
          _
        $region24: #{tpu_custom_call.1} parent=11 // pred_fallthru
          _
      $region12: #{tpu_custom_call.1} parent=5 // pred_fallthru
        _
      %p193 = scmp.lt.s32.totalorder %s18, 2
      // Predicated region
      $region25: #{tpu_custom_call.1} parent=5 // pred_check
        %p194 = pneg %p193
      $region26: #{tpu_custom_call.1} parent=5 // pred_check_branch
        %196 = sbr.rel (%p194) target = $region28
      $region27: #{tpu_custom_call.1} parent=5 // pred_region
        // Predicated region
        $region29: #{tpu_custom_call.1} parent=27 // pred_check
          %p197 = pneg %p38
        $region30: #{tpu_custom_call.1} parent=27 // pred_check_branch
          %199 = sbr.rel (%p197) target = $region32
        $region31: #{tpu_custom_call.1} parent=27 // pred_region
          %s200 = sand.u32 %s28, 1
          %s201 = scalar_lea.sflag [#allocation3], %s200
          %s202 = sand.u32 %s28, 1
          %s203 = smul.addr %s202, 128
          %s204 = scalar_lea.vmem [#allocation2], %s203
          %s205 = smul.u32 16, %s18
          %s207 = ssub.s32 2048, 2048
          %208 = vsyncadd %s201, %s207
          %s209 = smul.addr %s205, 2
          %s210 = smul.addr %s209, 64
          %s211 = scalar_lea.hbm %s0, %s210
          %s212 = sshll.u32 %s204, 4
          %s213 = int_to_ptr.vmem [resolvable:$true] %s212
          %218 = dma.hbm_to_vmem [thread:$0]  %s211, 2048, %s213, %s201, 128, 128, 8
        $region32: #{tpu_custom_call.1} parent=27 // pred_fallthru
          _
        // Predicated region
        $region33: #{tpu_custom_call.1} parent=27 // pred_check
          %p219 = pneg %p127
        $region34: #{tpu_custom_call.1} parent=27 // pred_check_branch
          %221 = sbr.rel (%p219) target = $region36
        $region35: #{tpu_custom_call.1} parent=27 // pred_region
          %p222 = scmp.lt.s32.totalorder %s18, 1
          %s223 = scalar_select %p222, %s18, 1
          %s224 = scalar_lea.vmem %s4, %s223
        $region36: #{tpu_custom_call.1} parent=27 // pred_fallthru
          _
      $region28: #{tpu_custom_call.1} parent=5 // pred_fallthru
        _
      %p225 = scmp.le.s32.totalorder 1, %s18
      %p226 = scmp.lt.s32.totalorder %s18, 3
      %p227 = pnand %p225, %p226
      %p228 = pneg %p227
      // Predicated region
      $region37: #{tpu_custom_call.1} parent=5 // pred_check
        _
      $region38: #{tpu_custom_call.1} parent=5 // pred_check_branch
        %230 = sbr.rel (%p227) target = $region40
      $region39: #{tpu_custom_call.1} parent=5 // pred_region
        %s231 = ssub.s32 %s18, 1
        %s232 = sand.u32 %s31, 1
        %s233 = scalar_lea.sflag [#allocation3], %s232
        %s234 = sand.u32 %s31, 1
        %s235 = smul.addr %s234, 128
        %s236 = scalar_lea.vmem [#allocation2], %s235
        // Predicated region
        $region41: #{tpu_custom_call.1} parent=39 // pred_check
          %p237 = pneg %p44
        $region42: #{tpu_custom_call.1} parent=39 // pred_check_branch
          %239 = sbr.rel (%p237) target = $region44
        $region43: #{tpu_custom_call.1} parent=39 // pred_region
          %240 = dma.done %s233, 2048
        $region44: #{tpu_custom_call.1} parent=39 // pred_fallthru
          _
        // Predicated region
        $region45: #{tpu_custom_call.1} parent=39 // pred_check
          %p241 = pneg %p65
        $region46: #{tpu_custom_call.1} parent=39 // pred_check_branch
          %243 = sbr.rel (%p241) target = $region48
        $region47: #{tpu_custom_call.1} parent=39 // pred_region
          %244 = dma.done [#allocation6], 4096
        $region48: #{tpu_custom_call.1} parent=39 // pred_fallthru
          _
        %s245 = sand.u32 %s31, 1
        %s246 = scalar_lea.sflag [#allocation3], %s245
        %s247 = sand.u32 %s31, 1
        %s248 = smul.addr %s247, 128
        %s249 = scalar_lea.vmem [#allocation2], %s248
        %p250 = pneg %p44
        %p251 = pneg %p41
        %p252 = pneg %p65
        %p253 = pneg %p62
        %p254 = pneg %p86
        %p255 = pneg %p83
        %p256 = pneg %p107
        %p257 = pneg %p104
        %p258 = scmp.lt.s32.totalorder %s23, 1
        %s259 = scalar_select %p258, %s23, 1
        %s260 = scalar_lea.vmem %s4, %s259
        %p261 = pneg %p133
        %p262 = pneg %p130
        %p263 = pneg %p159
        %p264 = pneg %p156
        %s265 = sand.u32 %s146, 1
        %s266 = scalar_lea.sflag [#allocation4], %s265
        %s267 = sand.u32 %s146, 1
        %s268 = scalar_lea.vmem [#allocation7], %s267
        %s269 = smul.u32 16, %s23
        %p270 = scmp.lt.s32.totalorder %s23, 1
        %s271 = scalar_select %p270, %s23, 1
        %s272 = scalar_lea.vmem %s4, %s271
        %v273 = vld [vmem:[%s236] sm:$0xff]
        %v274 = vld [vmem:[%s236 + $0x8] sm:$0xff]
        %v275 = vld [vmem:[%s236 + $0x10] sm:$0xff]
        %v276 = vld [vmem:[%s236 + $0x18] sm:$0xff]
        %v277 = vld [vmem:[%s236 + $0x20] sm:$0xff]
        %v278 = vld [vmem:[%s236 + $0x28] sm:$0xff]
        %v279 = vld [vmem:[%s236 + $0x30] sm:$0xff]
        %v280 = vld [vmem:[%s236 + $0x38] sm:$0xff]
        %v281 = vld [vmem:[%s236 + $0x40] sm:$0xff]
        %v282 = vld [vmem:[%s236 + $0x48] sm:$0xff]
        %v283 = vld [vmem:[%s236 + $0x50] sm:$0xff]
        %v284 = vld [vmem:[%s236 + $0x58] sm:$0xff]
        %v285 = vld [vmem:[%s236 + $0x60] sm:$0xff]
        %v286 = vld [vmem:[%s236 + $0x68] sm:$0xff]
        %v287 = vld [vmem:[%s236 + $0x70] sm:$0xff]
        %v288 = vld [vmem:[%s236 + $0x78] sm:$0xff]
        %v289 = vld [vmem:[#allocation5] sm:$0xff]
        %v290 = vld [vmem:[#allocation5 + $0x8] sm:$0xff]
        %v291 = vld [vmem:[#allocation5 + $0x10] sm:$0xff]
        %v292 = vld [vmem:[#allocation5 + $0x18] sm:$0xff]
        %v293 = vld [vmem:[#allocation5 + $0x20] sm:$0xff]
        %v294 = vld [vmem:[#allocation5 + $0x28] sm:$0xff]
        %v295 = vld [vmem:[#allocation5 + $0x30] sm:$0xff]
        %v296 = vld [vmem:[#allocation5 + $0x38] sm:$0xff]
        %v297 = vld [vmem:[#allocation5 + $0x40] sm:$0xff]
        %v298 = vld [vmem:[#allocation5 + $0x48] sm:$0xff]
        %v299 = vld [vmem:[#allocation5 + $0x50] sm:$0xff]
        %v300 = vld [vmem:[#allocation5 + $0x58] sm:$0xff]
        %v301 = vld [vmem:[#allocation5 + $0x60] sm:$0xff]
        %v302 = vld [vmem:[#allocation5 + $0x68] sm:$0xff]
        %v303 = vld [vmem:[#allocation5 + $0x70] sm:$0xff]
        %v304 = vld [vmem:[#allocation5 + $0x78] sm:$0xff]
        %v305 = vld [vmem:[#allocation5 + $0x80] sm:$0xff]
        %v306 = vld [vmem:[#allocation5 + $0x88] sm:$0xff]
        %v307 = vld [vmem:[#allocation5 + $0x90] sm:$0xff]
        %v308 = vld [vmem:[#allocation5 + $0x98] sm:$0xff]
        %v309 = vld [vmem:[#allocation5 + $0xa0] sm:$0xff]
        %v310 = vld [vmem:[#allocation5 + $0xa8] sm:$0xff]
        %v311 = vld [vmem:[#allocation5 + $0xb0] sm:$0xff]
        %v312 = vld [vmem:[#allocation5 + $0xb8] sm:$0xff]
        %v313 = vld [vmem:[#allocation5 + $0xc0] sm:$0xff]
        %v314 = vld [vmem:[#allocation5 + $0xc8] sm:$0xff]
        %v315 = vld [vmem:[#allocation5 + $0xd0] sm:$0xff]
        %v316 = vld [vmem:[#allocation5 + $0xd8] sm:$0xff]
        %v317 = vld [vmem:[#allocation5 + $0xe0] sm:$0xff]
        %v318 = vld [vmem:[#allocation5 + $0xe8] sm:$0xff]
        %v319 = vld [vmem:[#allocation5 + $0xf0] sm:$0xff]
        %v320 = vld [vmem:[#allocation5 + $0xf8] sm:$0xff]
        %v321 = vld [vmem:[%s2] sm:$0x3]
        %v323 = vlaneseq
        %v324 = vshrl.u32 %v323, 7
        %v325 = vsub.s32 0, %v324
        %v326 = vrot.slane %v321, %v325
        %v327 = vlaneseq
        %v328 = vshrl.u32 %v327, 7
        %v329 = vsub.s32 1, %v328
        %v330 = vrot.slane %v321, %v329
        %v349 = vunpack.c.l.b16 %v273
        %v350 = vunpack.c.h.b16 %v273
        %v351 = vunpack.c.l.b16 %v274
        %v352 = vunpack.c.h.b16 %v274
        %v353 = vunpack.c.l.b16 %v275
        %v354 = vunpack.c.h.b16 %v275
        %v355 = vunpack.c.l.b16 %v276
        %v356 = vunpack.c.h.b16 %v276
        %v357 = vunpack.c.l.b16 %v277
        %v358 = vunpack.c.h.b16 %v277
        %v359 = vunpack.c.l.b16 %v278
        %v360 = vunpack.c.h.b16 %v278
        %v361 = vunpack.c.l.b16 %v279
        %v362 = vunpack.c.h.b16 %v279
        %v363 = vunpack.c.l.b16 %v280
        %v364 = vunpack.c.h.b16 %v280
        %v365 = vunpack.c.l.b16 %v281
        %v366 = vunpack.c.h.b16 %v281
        %v367 = vunpack.c.l.b16 %v282
        %v368 = vunpack.c.h.b16 %v282
        %v369 = vunpack.c.l.b16 %v283
        %v370 = vunpack.c.h.b16 %v283
        %v371 = vunpack.c.l.b16 %v284
        %v372 = vunpack.c.h.b16 %v284
        %v373 = vunpack.c.l.b16 %v285
        %v374 = vunpack.c.h.b16 %v285
        %v375 = vunpack.c.l.b16 %v286
        %v376 = vunpack.c.h.b16 %v286
        %v377 = vunpack.c.l.b16 %v287
        %v378 = vunpack.c.h.b16 %v287
        %v379 = vunpack.c.l.b16 %v288
        %v380 = vunpack.c.h.b16 %v288
        %v381 = vpack.c.b16 %v351, %v349
        %v382 = vpack.c.b16 %v352, %v350
        %v383 = vpack.c.b16 %v355, %v353
        %v384 = vpack.c.b16 %v356, %v354
        %v385 = vpack.c.b16 %v359, %v357
        %v386 = vpack.c.b16 %v360, %v358
        %v387 = vpack.c.b16 %v363, %v361
        %v388 = vpack.c.b16 %v364, %v362
        %v389 = vpack.c.b16 %v367, %v365
        %v390 = vpack.c.b16 %v368, %v366
        %v391 = vpack.c.b16 %v371, %v369
        %v392 = vpack.c.b16 %v372, %v370
        %v393 = vpack.c.b16 %v375, %v373
        %v394 = vpack.c.b16 %v376, %v374
        %v395 = vpack.c.b16 %v379, %v377
        %v396 = vpack.c.b16 %v380, %v378
        %v445 = vunpack.c.l.b16 %v289
        %v446 = vunpack.c.h.b16 %v289
        %v447 = vunpack.c.l.b16 %v290
        %v448 = vunpack.c.h.b16 %v290
        %v449 = vunpack.c.l.b16 %v291
        %v450 = vunpack.c.h.b16 %v291
        %v451 = vunpack.c.l.b16 %v292
        %v452 = vunpack.c.h.b16 %v292
        %v453 = vunpack.c.l.b16 %v293
        %v454 = vunpack.c.h.b16 %v293
        %v455 = vunpack.c.l.b16 %v294
        %v456 = vunpack.c.h.b16 %v294
        %v457 = vunpack.c.l.b16 %v295
        %v458 = vunpack.c.h.b16 %v295
        %v459 = vunpack.c.l.b16 %v296
        %v460 = vunpack.c.h.b16 %v296
        %v461 = vunpack.c.l.b16 %v297
        %v462 = vunpack.c.h.b16 %v297
        %v463 = vunpack.c.l.b16 %v298
        %v464 = vunpack.c.h.b16 %v298
        %v465 = vunpack.c.l.b16 %v299
        %v466 = vunpack.c.h.b16 %v299
        %v467 = vunpack.c.l.b16 %v300
        %v468 = vunpack.c.h.b16 %v300
        %v469 = vunpack.c.l.b16 %v301
        %v470 = vunpack.c.h.b16 %v301
        %v471 = vunpack.c.l.b16 %v302
        %v472 = vunpack.c.h.b16 %v302
        %v473 = vunpack.c.l.b16 %v303
        %v474 = vunpack.c.h.b16 %v303
        %v475 = vunpack.c.l.b16 %v304
        %v476 = vunpack.c.h.b16 %v304
        %v477 = vunpack.c.l.b16 %v305
        %v478 = vunpack.c.h.b16 %v305
        %v479 = vunpack.c.l.b16 %v306
        %v480 = vunpack.c.h.b16 %v306
        %v481 = vunpack.c.l.b16 %v307
        %v482 = vunpack.c.h.b16 %v307
        %v483 = vunpack.c.l.b16 %v308
        %v484 = vunpack.c.h.b16 %v308
        %v485 = vunpack.c.l.b16 %v309
        %v486 = vunpack.c.h.b16 %v309
        %v487 = vunpack.c.l.b16 %v310
        %v488 = vunpack.c.h.b16 %v310
        %v489 = vunpack.c.l.b16 %v311
        %v490 = vunpack.c.h.b16 %v311
        %v491 = vunpack.c.l.b16 %v312
        %v492 = vunpack.c.h.b16 %v312
        %v493 = vunpack.c.l.b16 %v313
        %v494 = vunpack.c.h.b16 %v313
        %v495 = vunpack.c.l.b16 %v314
        %v496 = vunpack.c.h.b16 %v314
        %v497 = vunpack.c.l.b16 %v315
        %v498 = vunpack.c.h.b16 %v315
        %v499 = vunpack.c.l.b16 %v316
        %v500 = vunpack.c.h.b16 %v316
        %v501 = vunpack.c.l.b16 %v317
        %v502 = vunpack.c.h.b16 %v317
        %v503 = vunpack.c.l.b16 %v318
        %v504 = vunpack.c.h.b16 %v318
        %v505 = vunpack.c.l.b16 %v319
        %v506 = vunpack.c.h.b16 %v319
        %v507 = vunpack.c.l.b16 %v320
        %v508 = vunpack.c.h.b16 %v320
        %v509 = vpack.c.b16 %v447, %v445
        %v510 = vpack.c.b16 %v448, %v446
        %v511 = vpack.c.b16 %v451, %v449
        %v512 = vpack.c.b16 %v452, %v450
        %v513 = vpack.c.b16 %v455, %v453
        %v514 = vpack.c.b16 %v456, %v454
        %v515 = vpack.c.b16 %v459, %v457
        %v516 = vpack.c.b16 %v460, %v458
        %v517 = vpack.c.b16 %v463, %v461
        %v518 = vpack.c.b16 %v464, %v462
        %v519 = vpack.c.b16 %v467, %v465
        %v520 = vpack.c.b16 %v468, %v466
        %v521 = vpack.c.b16 %v471, %v469
        %v522 = vpack.c.b16 %v472, %v470
        %v523 = vpack.c.b16 %v475, %v473
        %v524 = vpack.c.b16 %v476, %v474
        %v525 = vpack.c.b16 %v479, %v477
        %v526 = vpack.c.b16 %v480, %v478
        %v527 = vpack.c.b16 %v483, %v481
        %v528 = vpack.c.b16 %v484, %v482
        %v529 = vpack.c.b16 %v487, %v485
        %v530 = vpack.c.b16 %v488, %v486
        %v531 = vpack.c.b16 %v491, %v489
        %v532 = vpack.c.b16 %v492, %v490
        %v533 = vpack.c.b16 %v495, %v493
        %v534 = vpack.c.b16 %v496, %v494
        %v535 = vpack.c.b16 %v499, %v497
        %v536 = vpack.c.b16 %v500, %v498
        %v537 = vpack.c.b16 %v503, %v501
        %v538 = vpack.c.b16 %v504, %v502
        %v539 = vpack.c.b16 %v507, %v505
        %v540 = vpack.c.b16 %v508, %v506
        %573 = vmatprep.subr.bf16.mxu0 %v524
        %574 = vmatpush1.bf16.msra.mxu0 %v523
        %575 = vmatprep.subr.bf16.mxu0 %v522
        %576 = vmatpush1.bf16.msra.mxu0 %v521
        %577 = vmatprep.subr.bf16.mxu0 %v520
        %578 = vmatpush1.bf16.msra.mxu0 %v519
        %579 = vmatprep.subr.bf16.mxu0 %v518
        %580 = vmatpush1.bf16.msra.mxu0 %v517
        %581 = vmatprep.subr.bf16.mxu0 %v516
        %582 = vmatpush1.bf16.msra.mxu0 %v515
        %583 = vmatprep.subr.bf16.mxu0 %v514
        %584 = vmatpush1.bf16.msra.mxu0 %v513
        %585 = vmatprep.subr.bf16.mxu0 %v512
        %586 = vmatpush1.bf16.msra.mxu0 %v511
        %587 = vmatprep.subr.bf16.mxu0 %v510
        %588 = vmatpush1.bf16.msra.mxu0 %v509
        %589 = vmatprep.subr.bf16.mxu0 %v540
        %590 = vmatpush2.bf16.msra.mxu0 %v539
        %591 = vmatprep.subr.bf16.mxu0 %v538
        %592 = vmatpush2.bf16.msra.mxu0 %v537
        %593 = vmatprep.subr.bf16.mxu0 %v536
        %594 = vmatpush2.bf16.msra.mxu0 %v535
        %595 = vmatprep.subr.bf16.mxu0 %v534
        %596 = vmatpush2.bf16.msra.mxu0 %v533
        %597 = vmatprep.subr.bf16.mxu0 %v532
        %598 = vmatpush2.bf16.msra.mxu0 %v531
        %599 = vmatprep.subr.bf16.mxu0 %v530
        %600 = vmatpush2.bf16.msra.mxu0 %v529
        %601 = vmatprep.subr.bf16.mxu0 %v528
        %602 = vmatpush2.bf16.msra.mxu0 %v527
        %603 = vmatprep.subr.bf16.mxu0 %v526
        %604 = vmatpush2.bf16.msra.mxu0 %v525
        %605 = vmatprep.mubr.bf16.mxu0 %v382
        %606 = vmatmul.mubr.bf16.gmra.mxu0 %v381
        %v607 = vpop.f32.mrf.mxu0
        %v608 = vadd.f32 %v326, %v607
        %v609 = vpop.f32.mrf.mxu0
        %v610 = vadd.f32 %v330, %v609
        %v611 = vpop.f32.mrf.mxu0
        %v612 = vadd.f32 %v326, %v611
        %v613 = vpop.f32.mrf.mxu0
        %v614 = vadd.f32 %v330, %v613
        %615 = vmatprep.mubr.bf16.mxu0 %v384
        %616 = vmatmul.mubr.bf16.gmra.mxu0 %v383
        %v617 = vpop.f32.mrf.mxu0
        %v618 = vadd.f32 %v326, %v617
        %v619 = vpop.f32.mrf.mxu0
        %v620 = vadd.f32 %v330, %v619
        %v621 = vpop.f32.mrf.mxu0
        %v622 = vadd.f32 %v326, %v621
        %v623 = vpop.f32.mrf.mxu0
        %v624 = vadd.f32 %v330, %v623
        %625 = vmatprep.mubr.bf16.mxu0 %v386
        %626 = vmatmul.mubr.bf16.gmra.mxu0 %v385
        %v627 = vpop.f32.mrf.mxu0
        %v628 = vadd.f32 %v326, %v627
        %v629 = vpop.f32.mrf.mxu0
        %v630 = vadd.f32 %v330, %v629
        %v631 = vpop.f32.mrf.mxu0
        %v632 = vadd.f32 %v326, %v631
        %v633 = vpop.f32.mrf.mxu0
        %v634 = vadd.f32 %v330, %v633
        %635 = vmatprep.mubr.bf16.mxu0 %v388
        %636 = vmatmul.mubr.bf16.gmra.mxu0 %v387
        %v637 = vpop.f32.mrf.mxu0
        %v638 = vadd.f32 %v326, %v637
        %v639 = vpop.f32.mrf.mxu0
        %v640 = vadd.f32 %v330, %v639
        %v641 = vpop.f32.mrf.mxu0
        %v642 = vadd.f32 %v326, %v641
        %v643 = vpop.f32.mrf.mxu0
        %v644 = vadd.f32 %v330, %v643
        %645 = vmatprep.mubr.bf16.mxu0 %v390
        %646 = vmatmul.mubr.bf16.gmra.mxu0 %v389
        %v647 = vpop.f32.mrf.mxu0
        %v648 = vadd.f32 %v326, %v647
        %v649 = vpop.f32.mrf.mxu0
        %v650 = vadd.f32 %v330, %v649
        %v651 = vpop.f32.mrf.mxu0
        %v652 = vadd.f32 %v326, %v651
        %v653 = vpop.f32.mrf.mxu0
        %v654 = vadd.f32 %v330, %v653
        %655 = vmatprep.mubr.bf16.mxu0 %v392
        %656 = vmatmul.mubr.bf16.gmra.mxu0 %v391
        %v657 = vpop.f32.mrf.mxu0
        %v658 = vadd.f32 %v326, %v657
        %v659 = vpop.f32.mrf.mxu0
        %v660 = vadd.f32 %v330, %v659
        %v661 = vpop.f32.mrf.mxu0
        %v662 = vadd.f32 %v326, %v661
        %v663 = vpop.f32.mrf.mxu0
        %v664 = vadd.f32 %v330, %v663
        %665 = vmatprep.mubr.bf16.mxu0 %v394
        %666 = vmatmul.mubr.bf16.gmra.mxu0 %v393
        %v667 = vpop.f32.mrf.mxu0
        %v668 = vadd.f32 %v326, %v667
        %v669 = vpop.f32.mrf.mxu0
        %v670 = vadd.f32 %v330, %v669
        %v671 = vpop.f32.mrf.mxu0
        %v672 = vadd.f32 %v326, %v671
        %v673 = vpop.f32.mrf.mxu0
        %v674 = vadd.f32 %v330, %v673
        %675 = vmatprep.mubr.bf16.mxu0 %v396
        %676 = vmatmul.mubr.bf16.gmra.mxu0 %v395
        %v677 = vpop.f32.mrf.mxu0
        %v678 = vadd.f32 %v326, %v677
        %v679 = vpop.f32.mrf.mxu0
        %v680 = vadd.f32 %v330, %v679
        %v681 = vpop.f32.mrf.mxu0
        %v682 = vadd.f32 %v326, %v681
        %v683 = vpop.f32.mrf.mxu0
        %v684 = vadd.f32 %v330, %v683
        %685 = vdwg.mxu0
        %v686 = vtanh.pop %v608
        %v687 = vtanh.pop %v610
        %v688 = vtanh.pop %v612
        %v689 = vtanh.pop %v614
        %v690 = vtanh.pop %v618
        %v691 = vtanh.pop %v620
        %v692 = vtanh.pop %v622
        %v693 = vtanh.pop %v624
        %v694 = vtanh.pop %v628
        %v695 = vtanh.pop %v630
        %v696 = vtanh.pop %v632
        %v697 = vtanh.pop %v634
        %v698 = vtanh.pop %v638
        %v699 = vtanh.pop %v640
        %v700 = vtanh.pop %v642
        %v701 = vtanh.pop %v644
        %v702 = vtanh.pop %v648
        %v703 = vtanh.pop %v650
        %v704 = vtanh.pop %v652
        %v705 = vtanh.pop %v654
        %v706 = vtanh.pop %v658
        %v707 = vtanh.pop %v660
        %v708 = vtanh.pop %v662
        %v709 = vtanh.pop %v664
        %v710 = vtanh.pop %v668
        %v711 = vtanh.pop %v670
        %v712 = vtanh.pop %v672
        %v713 = vtanh.pop %v674
        %v714 = vtanh.pop %v678
        %v715 = vtanh.pop %v680
        %v716 = vtanh.pop %v682
        %v717 = vtanh.pop %v684
        %v718 = vld [vmem:[%s3] sm:$0x3]
        %v720 = vlaneseq
        %v721 = vshrl.u32 %v720, 7
        %v722 = vsub.s32 0, %v721
        %v723 = vrot.slane %v718, %v722
        %v724 = vlaneseq
        %v725 = vshrl.u32 %v724, 7
        %v726 = vsub.s32 1, %v725
        %v727 = vrot.slane %v718, %v726
        %v730 = vmul.f32 %v686, %v723
        %v731 = vmul.f32 %v687, %v727
        %v732 = vmul.f32 %v688, %v723
        %v733 = vmul.f32 %v689, %v727
        %v734 = vmul.f32 %v690, %v723
        %v735 = vmul.f32 %v691, %v727
        %v736 = vmul.f32 %v692, %v723
        %v737 = vmul.f32 %v693, %v727
        %v738 = vmul.f32 %v694, %v723
        %v739 = vmul.f32 %v695, %v727
        %v740 = vmul.f32 %v696, %v723
        %v741 = vmul.f32 %v697, %v727
        %v742 = vmul.f32 %v698, %v723
        %v743 = vmul.f32 %v699, %v727
        %v744 = vmul.f32 %v700, %v723
        %v745 = vmul.f32 %v701, %v727
        %v746 = vmul.f32 %v702, %v723
        %v747 = vmul.f32 %v703, %v727
        %v748 = vmul.f32 %v704, %v723
        %v749 = vmul.f32 %v705, %v727
        %v750 = vmul.f32 %v706, %v723
        %v751 = vmul.f32 %v707, %v727
        %v752 = vmul.f32 %v708, %v723
        %v753 = vmul.f32 %v709, %v727
        %v754 = vmul.f32 %v710, %v723
        %v755 = vmul.f32 %v711, %v727
        %v756 = vmul.f32 %v712, %v723
        %v757 = vmul.f32 %v713, %v727
        %v758 = vmul.f32 %v714, %v723
        %v759 = vmul.f32 %v715, %v727
        %v760 = vmul.f32 %v716, %v723
        %v761 = vmul.f32 %v717, %v727
        %v762 = vadd.f32 %v730, %v731
        %763 = vadd.xlane.f32.xlu0 %v762
        %v764 = vpop.xlane.xlu0 %763
        %v765 = vadd.f32 %v732, %v733
        %766 = vadd.xlane.f32.xlu0 %v765
        %v767 = vpop.xlane.xlu0 %766
        %v768 = vadd.f32 %v734, %v735
        %769 = vadd.xlane.f32.xlu0 %v768
        %v770 = vpop.xlane.xlu0 %769
        %v771 = vadd.f32 %v736, %v737
        %772 = vadd.xlane.f32.xlu0 %v771
        %v773 = vpop.xlane.xlu0 %772
        %v774 = vadd.f32 %v738, %v739
        %775 = vadd.xlane.f32.xlu0 %v774
        %v776 = vpop.xlane.xlu0 %775
        %v777 = vadd.f32 %v740, %v741
        %778 = vadd.xlane.f32.xlu0 %v777
        %v779 = vpop.xlane.xlu0 %778
        %v780 = vadd.f32 %v742, %v743
        %781 = vadd.xlane.f32.xlu0 %v780
        %v782 = vpop.xlane.xlu0 %781
        %v783 = vadd.f32 %v744, %v745
        %784 = vadd.xlane.f32.xlu0 %v783
        %v785 = vpop.xlane.xlu0 %784
        %v786 = vadd.f32 %v746, %v747
        %787 = vadd.xlane.f32.xlu0 %v786
        %v788 = vpop.xlane.xlu0 %787
        %v789 = vadd.f32 %v748, %v749
        %790 = vadd.xlane.f32.xlu0 %v789
        %v791 = vpop.xlane.xlu0 %790
        %v792 = vadd.f32 %v750, %v751
        %793 = vadd.xlane.f32.xlu0 %v792
        %v794 = vpop.xlane.xlu0 %793
        %v795 = vadd.f32 %v752, %v753
        %796 = vadd.xlane.f32.xlu0 %v795
        %v797 = vpop.xlane.xlu0 %796
        %v798 = vadd.f32 %v754, %v755
        %799 = vadd.xlane.f32.xlu0 %v798
        %v800 = vpop.xlane.xlu0 %799
        %v801 = vadd.f32 %v756, %v757
        %802 = vadd.xlane.f32.xlu0 %v801
        %v803 = vpop.xlane.xlu0 %802
        %v804 = vadd.f32 %v758, %v759
        %805 = vadd.xlane.f32.xlu0 %v804
        %v806 = vpop.xlane.xlu0 %805
        %v807 = vadd.f32 %v760, %v761
        %808 = vadd.xlane.f32.xlu0 %v807
        %v809 = vpop.xlane.xlu0 %808
        %v810 = vld [vmem:[%s272] sm:$0x1]
        %v812 = vlaneseq
        %v813 = vshrl.u32 %v812, 7
        %v814 = vsub.s32 0, %v813
        %v815 = vrot.slane %v810, %v814
        %817 = vbcast.lane.b32.xlu0 %v815, 256
        %v818 = vpop.permute.xlu0 %817
        %s820 = sor.u32 256, 8
        %821 = vbcast.lane.b32.xlu0 %v815, %s820
        %v822 = vpop.permute.xlu0 %821
        %s824 = sor.u32 256, 16
        %825 = vbcast.lane.b32.xlu0 %v815, %s824
        %v826 = vpop.permute.xlu0 %825
        %s828 = sor.u32 256, 24
        %829 = vbcast.lane.b32.xlu0 %v815, %s828
        %v830 = vpop.permute.xlu0 %829
        %s832 = sor.u32 256, 32
        %833 = vbcast.lane.b32.xlu0 %v815, %s832
        %v834 = vpop.permute.xlu0 %833
        %s836 = sor.u32 256, 40
        %837 = vbcast.lane.b32.xlu0 %v815, %s836
        %v838 = vpop.permute.xlu0 %837
        %s840 = sor.u32 256, 48
        %841 = vbcast.lane.b32.xlu0 %v815, %s840
        %v842 = vpop.permute.xlu0 %841
        %s844 = sor.u32 256, 56
        %845 = vbcast.lane.b32.xlu0 %v815, %s844
        %v846 = vpop.permute.xlu0 %845
        %s848 = sor.u32 256, 64
        %849 = vbcast.lane.b32.xlu0 %v815, %s848
        %v850 = vpop.permute.xlu0 %849
        %s852 = sor.u32 256, 72
        %853 = vbcast.lane.b32.xlu0 %v815, %s852
        %v854 = vpop.permute.xlu0 %853
        %s856 = sor.u32 256, 80
        %857 = vbcast.lane.b32.xlu0 %v815, %s856
        %v858 = vpop.permute.xlu0 %857
        %s860 = sor.u32 256, 88
        %861 = vbcast.lane.b32.xlu0 %v815, %s860
        %v862 = vpop.permute.xlu0 %861
        %s864 = sor.u32 256, 96
        %865 = vbcast.lane.b32.xlu0 %v815, %s864
        %v866 = vpop.permute.xlu0 %865
        %s868 = sor.u32 256, 104
        %869 = vbcast.lane.b32.xlu0 %v815, %s868
        %v870 = vpop.permute.xlu0 %869
        %s872 = sor.u32 256, 112
        %873 = vbcast.lane.b32.xlu0 %v815, %s872
        %v874 = vpop.permute.xlu0 %873
        %s876 = sor.u32 256, 120
        %877 = vbcast.lane.b32.xlu0 %v815, %s876
        %v878 = vpop.permute.xlu0 %877
        %v895 = vmul.f32 %v764, %v818
        %v896 = vmul.f32 %v767, %v822
        %v897 = vmul.f32 %v770, %v826
        %v898 = vmul.f32 %v773, %v830
        %v899 = vmul.f32 %v776, %v834
        %v900 = vmul.f32 %v779, %v838
        %v901 = vmul.f32 %v782, %v842
        %v902 = vmul.f32 %v785, %v846
        %v903 = vmul.f32 %v788, %v850
        %v904 = vmul.f32 %v791, %v854
        %v905 = vmul.f32 %v794, %v858
        %v906 = vmul.f32 %v797, %v862
        %v907 = vmul.f32 %v800, %v866
        %v908 = vmul.f32 %v803, %v870
        %v909 = vmul.f32 %v806, %v874
        %v910 = vmul.f32 %v809, %v878
        %927 = vset.pattern.permute.xlu0 0
        %928 = vperm.xlu0 %927, %v895
        %v929 = vpop.permute.xlu0 %928
        %930 = vset.pattern.permute.xlu0 0
        %931 = vperm.xlu0 %930, %v896
        %v932 = vpop.permute.xlu0 %931
        %933 = vset.pattern.permute.xlu0 0
        %934 = vperm.xlu0 %933, %v897
        %v935 = vpop.permute.xlu0 %934
        %936 = vset.pattern.permute.xlu0 0
        %937 = vperm.xlu0 %936, %v898
        %v938 = vpop.permute.xlu0 %937
        %939 = vset.pattern.permute.xlu0 0
        %940 = vperm.xlu0 %939, %v899
        %v941 = vpop.permute.xlu0 %940
        %942 = vset.pattern.permute.xlu0 0
        %943 = vperm.xlu0 %942, %v900
        %v944 = vpop.permute.xlu0 %943
        %945 = vset.pattern.permute.xlu0 0
        %946 = vperm.xlu0 %945, %v901
        %v947 = vpop.permute.xlu0 %946
        %948 = vset.pattern.permute.xlu0 0
        %949 = vperm.xlu0 %948, %v902
        %v950 = vpop.permute.xlu0 %949
        %951 = vset.pattern.permute.xlu0 0
        %952 = vperm.xlu0 %951, %v903
        %v953 = vpop.permute.xlu0 %952
        %954 = vset.pattern.permute.xlu0 0
        %955 = vperm.xlu0 %954, %v904
        %v956 = vpop.permute.xlu0 %955
        %957 = vset.pattern.permute.xlu0 0
        %958 = vperm.xlu0 %957, %v905
        %v959 = vpop.permute.xlu0 %958
        %960 = vset.pattern.permute.xlu0 0
        %961 = vperm.xlu0 %960, %v906
        %v962 = vpop.permute.xlu0 %961
        %963 = vset.pattern.permute.xlu0 0
        %964 = vperm.xlu0 %963, %v907
        %v965 = vpop.permute.xlu0 %964
        %966 = vset.pattern.permute.xlu0 0
        %967 = vperm.xlu0 %966, %v908
        %v968 = vpop.permute.xlu0 %967
        %969 = vset.pattern.permute.xlu0 0
        %970 = vperm.xlu0 %969, %v909
        %v971 = vpop.permute.xlu0 %970
        %972 = vset.pattern.permute.xlu0 0
        %973 = vperm.xlu0 %972, %v910
        %v974 = vpop.permute.xlu0 %973
        %v975 = vlaneseq
        %v976 = vand.u32 %v975, 127
        %v977 = vlaneseq
        %v978 = vshrl.u32 %v977, 7
        %v979 = vsub.s32 %v976, %v978
        %v980 = vrot.slane %v929, %v979
        %v981 = vadd.s32 %v976, 4294967288
        %v982 = vlaneseq
        %v983 = vshrl.u32 %v982, 7
        %v984 = vsub.s32 %v981, %v983
        %v985 = vrot.slane %v932, %v984
        %vm986 = vcmask 130112
        %v987 = vsel %vm986, %v985, %v980
        %v988 = vadd.s32 %v976, 4294967280
        %v989 = vlaneseq
        %v990 = vshrl.u32 %v989, 7
        %v991 = vsub.s32 %v988, %v990
        %v992 = vrot.slane %v935, %v991
        %vm993 = vcmask 195712
        %v994 = vsel %vm993, %v992, %v987
        %v995 = vadd.s32 %v976, 4294967272
        %v996 = vlaneseq
        %v997 = vshrl.u32 %v996, 7
        %v998 = vsub.s32 %v995, %v997
        %v999 = vrot.slane %v938, %v998
        %vm1000 = vcmask 261312
        %v1001 = vsel %vm1000, %v999, %v994
        %v1002 = vadd.s32 %v976, 4294967264
        %v1003 = vlaneseq
        %v1004 = vshrl.u32 %v1003, 7
        %v1005 = vsub.s32 %v1002, %v1004
        %v1006 = vrot.slane %v941, %v1005
        %vm1007 = vcmask 326912
        %v1008 = vsel %vm1007, %v1006, %v1001
        %v1009 = vadd.s32 %v976, 4294967256
        %v1010 = vlaneseq
        %v1011 = vshrl.u32 %v1010, 7
        %v1012 = vsub.s32 %v1009, %v1011
        %v1013 = vrot.slane %v944, %v1012
        %vm1014 = vcmask 392512
        %v1015 = vsel %vm1014, %v1013, %v1008
        %v1016 = vadd.s32 %v976, 4294967248
        %v1017 = vlaneseq
        %v1018 = vshrl.u32 %v1017, 7
        %v1019 = vsub.s32 %v1016, %v1018
        %v1020 = vrot.slane %v947, %v1019
        %vm1021 = vcmask 458112
        %v1022 = vsel %vm1021, %v1020, %v1015
        %v1023 = vadd.s32 %v976, 4294967240
        %v1024 = vlaneseq
        %v1025 = vshrl.u32 %v1024, 7
        %v1026 = vsub.s32 %v1023, %v1025
        %v1027 = vrot.slane %v950, %v1026
        %vm1028 = vcmask 523712
        %v1029 = vsel %vm1028, %v1027, %v1022
        %v1030 = vadd.s32 %v976, 4294967232
        %v1031 = vlaneseq
        %v1032 = vshrl.u32 %v1031, 7
        %v1033 = vsub.s32 %v1030, %v1032
        %v1034 = vrot.slane %v953, %v1033
        %vm1035 = vcmask 589312
        %v1036 = vsel %vm1035, %v1034, %v1029
        %v1037 = vadd.s32 %v976, 4294967224
        %v1038 = vlaneseq
        %v1039 = vshrl.u32 %v1038, 7
        %v1040 = vsub.s32 %v1037, %v1039
        %v1041 = vrot.slane %v956, %v1040
        %vm1042 = vcmask 654912
        %v1043 = vsel %vm1042, %v1041, %v1036
        %v1044 = vadd.s32 %v976, 4294967216
        %v1045 = vlaneseq
        %v1046 = vshrl.u32 %v1045, 7
        %v1047 = vsub.s32 %v1044, %v1046
        %v1048 = vrot.slane %v959, %v1047
        %vm1049 = vcmask 720512
        %v1050 = vsel %vm1049, %v1048, %v1043
        %v1051 = vadd.s32 %v976, 4294967208
        %v1052 = vlaneseq
        %v1053 = vshrl.u32 %v1052, 7
        %v1054 = vsub.s32 %v1051, %v1053
        %v1055 = vrot.slane %v962, %v1054
        %vm1056 = vcmask 786112
        %v1057 = vsel %vm1056, %v1055, %v1050
        %v1058 = vadd.s32 %v976, 4294967200
        %v1059 = vlaneseq
        %v1060 = vshrl.u32 %v1059, 7
        %v1061 = vsub.s32 %v1058, %v1060
        %v1062 = vrot.slane %v965, %v1061
        %vm1063 = vcmask 851712
        %v1064 = vsel %vm1063, %v1062, %v1057
        %v1065 = vadd.s32 %v976, 4294967192
        %v1066 = vlaneseq
        %v1067 = vshrl.u32 %v1066, 7
        %v1068 = vsub.s32 %v1065, %v1067
        %v1069 = vrot.slane %v968, %v1068
        %vm1070 = vcmask 917312
        %v1071 = vsel %vm1070, %v1069, %v1064
        %v1072 = vadd.s32 %v976, 4294967184
        %v1073 = vlaneseq
        %v1074 = vshrl.u32 %v1073, 7
        %v1075 = vsub.s32 %v1072, %v1074
        %v1076 = vrot.slane %v971, %v1075
        %vm1077 = vcmask 982912
        %v1078 = vsel %vm1077, %v1076, %v1071
        %v1079 = vadd.s32 %v976, 4294967176
        %v1080 = vlaneseq
        %v1081 = vshrl.u32 %v1080, 7
        %v1082 = vsub.s32 %v1079, %v1081
        %v1083 = vrot.slane %v974, %v1082
        %vm1084 = vcmask 1048512
        %v1085 = vsel %vm1084, %v1083, %v1078
        %1087 = vst [vmem:[%s268] sm:$0x1] %v1085
        %s1088 = sand.u32 %s146, 1
        %s1089 = scalar_lea.sflag [#allocation4], %s1088
        %s1090 = sand.u32 %s146, 1
        %s1091 = scalar_lea.vmem [#allocation7], %s1090
        // Predicated region
        $region49: #{tpu_custom_call.1} parent=39 // pred_check
          %p1092 = pneg %p156
        $region50: #{tpu_custom_call.1} parent=39 // pred_check_branch
          %1094 = sbr.rel (%p1092) target = $region52
        $region51: #{tpu_custom_call.1} parent=39 // pred_region
          %s1096 = ssub.s32 16, 16
          %1097 = vsyncadd %s1089, %s1096
          %s1098 = smul.addr %s23, 16
          %s1099 = scalar_lea.hbm %s5, %s1098
          %s1101 = sshll.u32 %s1091, 4
          %s1102 = int_to_ptr.vmem [resolvable:$true] %s1101
          %1104 = dma.vmem_to_hbm [thread:$0]  %s1102, 16, %s1099, %s1089
        $region52: #{tpu_custom_call.1} parent=39 // pred_fallthru
          _
      $region40: #{tpu_custom_call.1} parent=5 // pred_fallthru
        _
      %p1105 = scmp.le.s32.totalorder 2, %s18
      // Predicated region
      $region53: #{tpu_custom_call.1} parent=5 // pred_check
        %p1106 = pneg %p1105
      $region54: #{tpu_custom_call.1} parent=5 // pred_check_branch
        %1108 = sbr.rel (%p1106) target = $region56
      $region55: #{tpu_custom_call.1} parent=5 // pred_region
        %s1109 = ssub.s32 %s18, 2
        // Predicated region
        $region57: #{tpu_custom_call.1} parent=55 // pred_check
          %p1110 = pneg %p162
        $region58: #{tpu_custom_call.1} parent=55 // pred_check_branch
          %1112 = sbr.rel (%p1110) target = $region60
        $region59: #{tpu_custom_call.1} parent=55 // pred_region
          %s1113 = sand.u32 %s147, 1
          %s1114 = scalar_lea.sflag [#allocation4], %s1113
          %s1115 = sand.u32 %s147, 1
          %s1116 = scalar_lea.vmem [#allocation7], %s1115
          %1117 = dma.done %s1114, 16
        $region60: #{tpu_custom_call.1} parent=55 // pred_fallthru
          _
      $region56: #{tpu_custom_call.1} parent=5 // pred_fallthru
        _
    $region6: #{tpu_custom_call.1} parent=1 // loop_footer
      %s22 = sadd.s32 1, %s18
    $region7: #{tpu_custom_call.1} parent=1 // loop_footer_branch
      %17 = sbr.rel target = $region3
    $region8: #{tpu_custom_call.1} parent=1 // loop_exit
      _
    %1118 = vsyncpa [#allocation3], 1
    %s1119 = scalar_lea.sflag [#allocation3], 1
    %1120 = vsyncpa %s1119, 1
    %1121 = vsyncpa [#allocation6], 1
    %1122 = vsyncpa [#allocation4], 1
    %s1123 = scalar_lea.sflag [#allocation4], 1
    %1124 = vsyncpa %s1123, 1

</llo_original>
